<compile_context>
chip_gen: v7x
topology: tpu7x:2x2x1
jax: 0.10.0
libtpu: 0.0.40
codegen_flags: <defaults>
</compile_context>

<pallas_src>
import jax
import jax.numpy as jnp
import numpy as np
from jax.experimental import pallas as pl
from jax.experimental.pallas import tpu as pltpu

# ---- small, TPU-friendly stand-in sizes -------------------------------------
BATCH = 8          # batch size
SEQ = 8            # token sequence length fed to the (stand-in) transformer
HIDDEN = 128       # transformer hidden size (bert would be 768)
NUM_HEADS = 8      # documentary only: with seq length 1 the MHA collapses
NUM_LABELS = 8     # eight Linear(hidden, 1) classifiers
LABEL_PAD = 128    # classifier columns padded to a full 128-lane slab
VOCAB = 64
LN_EPS = 1e-5      # nn.LayerNorm default eps


# -----------------------------------------------------------------------------
# Pallas kernel: fused (V@O) projection -> residual + LayerNorm -> 8 heads
# -----------------------------------------------------------------------------
def _cultural_head_kernel(cls_ref, weff_ref, vecs_ref, wcls_ref, out_ref):
    x = cls_ref[...]                                     # (B, H) f32
    x_bf = x.astype(jnp.bfloat16)                        # MXU operand only

    b_eff = vecs_ref[0:1, :]                             # (1, H) f32
    b_cls = vecs_ref[1:2, :]                             # (1, LABEL_PAD) f32

    # MultiheadAttention with a single query/key: attention weights == 1, so
    # the output is the (pre-fused) value @ out projection.  bf16 MXU matmul
    # with f32 accumulation.
    attended = jnp.dot(x_bf, weff_ref[...],
                       preferred_element_type=jnp.float32) + b_eff

    # residual + LayerNorm (f32 on VPU/EUP).  Stats via E[y^2]-E[y]^2 so both
    # XLU reductions issue concurrently (mildly less stable than the centered
    # form; acceptable at LN scale / 1e-3 tolerance).
    y = attended + x
    inv_h = jnp.float32(1.0 / HIDDEN)
    s1 = jnp.sum(y, axis=-1, keepdims=True)
    s2 = jnp.sum(y * y, axis=-1, keepdims=True)
    mean = s1 * inv_h
    var = s2 * inv_h - mean * mean
    normed = (y - mean) * jax.lax.rsqrt(var + LN_EPS)
    # LayerNorm affine (gamma/beta) is folded into wcls/b_cls at trace time.

    # Dropout(pooled) is identity at inference.
    # 8 x Linear(HIDDEN, 1), zero-padded to 128 lanes -> single bf16 MXU matmul
    # and an unmasked, lane-dense store.
    logits = jnp.dot(normed.astype(jnp.bfloat16), wcls_ref[...],
                     preferred_element_type=jnp.float32) + b_cls
    out_ref[...] = logits


def cultural_head_pallas(cls_f32, kparams):
    """Runs the post-transformer head of CulturalPatternClassifier in Pallas."""
    b = cls_f32.shape[0]
    args = (cls_f32, kparams["w_eff"], kparams["vecs"], kparams["w_cls_pad"])

    flops = 2 * b * HIDDEN * HIDDEN + 2 * b * HIDDEN * LABEL_PAD
    bytes_accessed = (cls_f32.size * 4                    # f32 activations in
                      + kparams["w_eff"].size * 2         # bf16 fused V@O
                      + kparams["vecs"].size * 4          # f32 bias slab
                      + kparams["w_cls_pad"].size * 2     # bf16 classifier
                      + b * LABEL_PAD * 4)                # f32 logits out

    padded = pl.pallas_call(
        _cultural_head_kernel,
        out_shape=jax.ShapeDtypeStruct((b, LABEL_PAD), jnp.float32),
        in_specs=[pl.BlockSpec(memory_space=pltpu.MemorySpace.VMEM)
                  for _ in args],
        out_specs=pl.BlockSpec(memory_space=pltpu.MemorySpace.VMEM),
        cost_estimate=pl.CostEstimate(flops=flops, transcendentals=b,
                                      bytes_accessed=bytes_accessed),
    )(*args)
    return padded[:, :NUM_LABELS]


# -----------------------------------------------------------------------------
# Parameter construction (deterministic), fusion, and reference implementation
# -----------------------------------------------------------------------------
def make_params(key):
    ks = jax.random.split(key, 6)
    std = 0.02
    return {
        # MultiheadAttention value / out projections ([in, out] layout).
        # Q/K projections are omitted: with sequence length 1 they only feed a
        # softmax whose output is identically 1, so they never affect logits.
        "wv": jax.random.normal(ks[0], (HIDDEN, HIDDEN), jnp.float32) * std,
        "bv": jax.random.normal(ks[1], (1, HIDDEN), jnp.float32) * std,
        "wo": jax.random.normal(ks[2], (HIDDEN, HIDDEN), jnp.float32) * std,
        "bo": jax.random.normal(ks[3], (1, HIDDEN), jnp.float32) * std,
        # LayerNorm (nn.LayerNorm defaults: weight=1, bias=0)
        "ln_gamma": jnp.ones((1, HIDDEN), jnp.float32),
        "ln_beta": jnp.zeros((1, HIDDEN), jnp.float32),
        # 8 x Linear(HIDDEN, 1) packed into one [HIDDEN, 8] matrix
        "w_cls": jax.random.normal(ks[4], (HIDDEN, NUM_LABELS), jnp.float32) * std,
        "b_cls": jax.random.normal(ks[5], (1, NUM_LABELS), jnp.float32) * std,
    }


def fuse_params(p):
    """Trace-time algebraic fusion + dtype packing of the kernel parameters."""
    # V and out projections pre-multiplied; fed to the MXU in bf16.
    w_eff = (p["wv"] @ p["wo"]).astype(jnp.bfloat16)             # (H, H) bf16
    b_eff = (p["bv"] @ p["wo"] + p["bo"]).reshape(HIDDEN)        # (H,)   f32

    # Fold LayerNorm affine into the classifier:
    #   (normed * gamma + beta) @ W + b == normed @ (gamma[:,None]*W) + (beta@W + b)
    w_fold = p["ln_gamma"].reshape(HIDDEN, 1) * p["w_cls"]       # (H, 8)
    b_fold = (p["ln_beta"].reshape(1, HIDDEN) @ p["w_cls"]
              + p["b_cls"]).reshape(NUM_LABELS)                  # (8,)

    w_cls_pad = jnp.zeros((HIDDEN, LABEL_PAD), jnp.float32)
    w_cls_pad = w_cls_pad.at[:, :NUM_LABELS].set(w_fold).astype(jnp.bfloat16)

    # All remaining (1,H)-class vectors packed into a single (8,128) f32 slab:
    #   row 0 = b_eff, row 1 = folded classifier bias (zero-padded).
    vecs = jnp.zeros((8, LABEL_PAD), jnp.float32)
    vecs = vecs.at[0, :HIDDEN].set(b_eff)
    vecs = vecs.at[1, :NUM_LABELS].set(b_fold)

    return {"w_eff": w_eff, "vecs": vecs, "w_cls_pad": w_cls_pad}


def reference_head(cls_f32, p):
    """Pure-JAX reference of the post-transformer forward (eval), matching the
    kernel's quantization choices (bf16 MXU operands, f32 accumulation) so the
    comparison is not dominated by bf16 rounding of the fused weights."""
    x = cls_f32
    x_bf = x.astype(jnp.bfloat16).astype(jnp.float32)
    w_eff = (p["wv"] @ p["wo"]).astype(jnp.bfloat16).astype(jnp.float32)
    b_eff = p["bv"] @ p["wo"] + p["bo"]
    # seq len == 1 -> attention weights are exactly 1 -> output == V@O proj
    attended = x_bf @ w_eff + b_eff
    y = attended + x
    mean = jnp.mean(y, axis=-1, keepdims=True)
    var = jnp.mean((y - mean) ** 2, axis=-1, keepdims=True)
    normed = (y - mean) * jax.lax.rsqrt(var + LN_EPS)
    normed = normed * p["ln_gamma"] + p["ln_beta"]
    n_bf = normed.astype(jnp.bfloat16).astype(jnp.float32)
    w_c = p["w_cls"].astype(jnp.bfloat16).astype(jnp.float32)
    return n_bf @ w_c + p["b_cls"]


def transformer_standin_cls(input_ids, attention_mask, emb_table):
    # TODO(synk): pretrained bert-base-multilingual-cased encoder has no
    # in-script equivalent; replaced by a deterministic embedding lookup.
    # Only the position-0 (CLS) row reaches the head, so only that row is
    # gathered -- the (B,S,H) hidden state is never materialized.
    cls_ids = input_ids[:, 0]                                    # (B,)
    cls = emb_table[cls_ids]                                     # (B, H)
    cls = cls * attention_mask[:, 0:1].astype(cls.dtype)
    return cls


def cultural_pattern_classifier_forward(input_ids, attention_mask, emb_table,
                                        kparams):
    cls_output = transformer_standin_cls(input_ids, attention_mask, emb_table)
    return cultural_head_pallas(cls_output, kparams)


if __name__ == "__main__":
    key = jax.random.PRNGKey(0)
    k_ids, k_emb, k_par = jax.random.split(key, 3)

    input_ids = jax.random.randint(k_ids, (BATCH, SEQ), 0, VOCAB, dtype=jnp.int32)
    attention_mask = jnp.ones((BATCH, SEQ), jnp.int32)
    emb_table = jax.random.normal(k_emb, (VOCAB, HIDDEN), jnp.float32) * 0.1
    params = make_params(k_par)
    kparams = fuse_params(params)

    logits = cultural_pattern_classifier_forward(
        input_ids, attention_mask, emb_table, kparams)
    logits = jax.block_until_ready(logits)

    # sanity check against a quantization-matched pure-JAX reference
    cls = transformer_standin_cls(input_ids, attention_mask, emb_table)
    ref = reference_head(cls, params)
    assert logits.shape == (BATCH, NUM_LABELS)
    np.testing.assert_allclose(np.asarray(logits), np.asarray(ref),
                               rtol=2e-3, atol=2e-3)

    print("KERNEL_OK")
</pallas_src>

<mosaic_0001>
module attributes {stable_mosaic.version = 11 : i64} {
  func.func @_cultural_head_kernel(%arg0: memref<8x128xf32, #tpu.memory_space<vmem>>, %arg1: memref<128x128xbf16, #tpu.memory_space<vmem>>, %arg2: memref<8x128xf32, #tpu.memory_space<vmem>>, %arg3: memref<128x128xbf16, #tpu.memory_space<vmem>>, %arg4: memref<8x128xf32, #tpu.memory_space<vmem>>) attributes {dimension_semantics = [], scalar_prefetch = 0 : i64, scratch_operands = 0 : i64, tpu.core_type = #tpu.core_type<tc>} {
    %c0 = arith.constant 0 : index
    %c0_0 = arith.constant 0 : index
    %0 = vector.load %arg0[%c0, %c0_0] : memref<8x128xf32, #tpu.memory_space<vmem>>, vector<8x128xf32>
    %1 = arith.truncf %0 : vector<8x128xf32> to vector<8x128xbf16>
    %c0_1 = arith.constant 0 : index
    %c0_2 = arith.constant 0 : index
    %2 = vector.load %arg2[%c0_1, %c0_2] : memref<8x128xf32, #tpu.memory_space<vmem>>, vector<1x128xf32>
    %c1 = arith.constant 1 : index
    %c0_3 = arith.constant 0 : index
    %3 = vector.load %arg2[%c1, %c0_3] : memref<8x128xf32, #tpu.memory_space<vmem>>, vector<1x128xf32>
    %c0_4 = arith.constant 0 : index
    %c0_5 = arith.constant 0 : index
    %4 = vector.load %arg1[%c0_4, %c0_5] : memref<128x128xbf16, #tpu.memory_space<vmem>>, vector<128x128xbf16>
    %cst = arith.constant dense<0.000000e+00> : vector<8x128xf32>
    %5 = tpu.matmul %1, %4, %cst {dimension_numbers = #tpu.dot_dimension_numbers<[1], [0], [0], [1], [0, 0, 1, 1], [], []>} : vector<8x128xbf16>, vector<128x128xbf16>, vector<8x128xf32> -> vector<8x128xf32>
    %6 = vector.broadcast %2 : vector<1x128xf32> to vector<8x128xf32>
    %7 = arith.addf %5, %6 : vector<8x128xf32>
    %8 = arith.addf %7, %0 : vector<8x128xf32>
    %cst_6 = arith.constant dense<0.000000e+00> : vector<8xf32>
    %9 = vector.multi_reduction <add>, %8, %cst_6 [1] : vector<8x128xf32> to vector<8xf32>
    %10 = vector.shape_cast %9 : vector<8xf32> to vector<8x1xf32>
    %11 = arith.mulf %8, %8 : vector<8x128xf32>
    %cst_7 = arith.constant dense<0.000000e+00> : vector<8xf32>
    %12 = vector.multi_reduction <add>, %11, %cst_7 [1] : vector<8x128xf32> to vector<8xf32>
    %13 = vector.shape_cast %12 : vector<8xf32> to vector<8x1xf32>
    %cst_8 = arith.constant 7.812500e-03 : f32
    %14 = vector.broadcast %cst_8 : f32 to vector<8x1xf32>
    %15 = arith.mulf %10, %14 : vector<8x1xf32>
    %cst_9 = arith.constant 7.812500e-03 : f32
    %16 = vector.broadcast %cst_9 : f32 to vector<8x1xf32>
    %17 = arith.mulf %13, %16 : vector<8x1xf32>
    %18 = arith.mulf %15, %15 : vector<8x1xf32>
    %19 = arith.subf %17, %18 : vector<8x1xf32>
    %20 = vector.broadcast %15 : vector<8x1xf32> to vector<8x128xf32>
    %21 = arith.subf %8, %20 : vector<8x128xf32>
    %cst_10 = arith.constant 9.99999974E-6 : f32
    %22 = vector.broadcast %cst_10 : f32 to vector<8x1xf32>
    %23 = arith.addf %19, %22 : vector<8x1xf32>
    %24 = math.rsqrt %23 : vector<8x1xf32>
    %25 = vector.broadcast %24 : vector<8x1xf32> to vector<8x128xf32>
    %26 = arith.mulf %21, %25 : vector<8x128xf32>
    %27 = arith.truncf %26 : vector<8x128xf32> to vector<8x128xbf16>
    %c0_11 = arith.constant 0 : index
    %c0_12 = arith.constant 0 : index
    %28 = vector.load %arg3[%c0_11, %c0_12] : memref<128x128xbf16, #tpu.memory_space<vmem>>, vector<128x128xbf16>
    %cst_13 = arith.constant dense<0.000000e+00> : vector<8x128xf32>
    %29 = tpu.matmul %27, %28, %cst_13 {dimension_numbers = #tpu.dot_dimension_numbers<[1], [0], [0], [1], [0, 0, 1, 1], [], []>} : vector<8x128xbf16>, vector<128x128xbf16>, vector<8x128xf32> -> vector<8x128xf32>
    %30 = vector.broadcast %3 : vector<1x128xf32> to vector<8x128xf32>
    %31 = arith.addf %29, %30 : vector<8x128xf32>
    %c0_14 = arith.constant 0 : index
    %c0_15 = arith.constant 0 : index
    %32 = vector.load %arg4[%c0_14, %c0_15] : memref<8x128xf32, #tpu.memory_space<vmem>>, vector<8x128xf32>
    tpu.vector_store %arg4[%c0_14, %c0_15], %31 {strides = array<i32>} : memref<8x128xf32, #tpu.memory_space<vmem>>, vector<8x128xf32>,
    return
  }
}

</mosaic_0001>

<llo_original>
// kernel: tpu_custom_call.1
$region0: #{tpu_custom_call.1}
  #allocation0 [shape = 'u32[]', space=smem, size = 0x4, offset = 0x4, fixed_abs, tag = 'smem constant byte address 0x4 - core index']
  #allocation1 [shape = 'u32[144,128]{1,0:T(1,128)}', space=vmem, size = 0x12000, scoped, tag = 'internal scratch']
  %s0 = inlined_call_operand.hbm [shape: f32[8,128], index: 0, kind: input, shape index: {}]
  %s1 = inlined_call_operand.hbm [shape: bf16[128,128], index: 1, kind: input, shape index: {}]
  %s2 = inlined_call_operand.hbm [shape: f32[8,128], index: 2, kind: input, shape index: {}]
  %s3 = inlined_call_operand.hbm [shape: bf16[128,128], index: 3, kind: input, shape index: {}]
  %s4 = inlined_call_operand.hbm [shape: f32[8,128], index: 4, kind: output, shape index: {}]
  %s5 = sld [smem:[#allocation0]]
  $region42: #{tpu_custom_call.1} parent=0
    _
  %s7 = ssub.s32 1, %s5
  %s8 = scalar_select 0, %s7, %s5
  $region1: #{tpu_custom_call.1} parent=0
    #allocation2 [shape = 'u8[4096]{0}', space=vmem, size = 0x1000, scoped, tag = 'input window, operand 0, single buffered']
    #allocation3 [shape = 's32[1]{0}', space=sflag, size = 0x4, scoped, tag = 'scoped memory for tpu_custom_call.1']
    #allocation4 [shape = 's32[1]{0}', space=sflag, size = 0x4, scoped, tag = 'scoped memory for tpu_custom_call.1']
    #allocation5 [shape = 'u8[32768]{0}', space=vmem, size = 0x8000, scoped, tag = 'input window, operand 1, single buffered']
    #allocation6 [shape = 's32[1]{0}', space=sflag, size = 0x4, scoped, tag = 'scoped memory for tpu_custom_call.1']
    #allocation7 [shape = 'u8[4096]{0}', space=vmem, size = 0x1000, scoped, tag = 'input window, operand 2, single buffered']
    #allocation8 [shape = 'u8[32768]{0}', space=vmem, size = 0x8000, scoped, tag = 'input window, operand 3, single buffered']
    #allocation9 [shape = 's32[1]{0}', space=sflag, size = 0x4, scoped, tag = 'scoped memory for tpu_custom_call.1']
    #allocation10 [shape = 'u8[4096]{0}', space=vmem, size = 0x1000, scoped, tag = 'output window, operand 0, single buffered']
    %9 = vsyncpa [#allocation3], 0
    %10 = vsyncpa [#allocation6], 0
    %11 = vsyncpa [#allocation9], 0
    %12 = vsyncpa [#allocation4], 0
    // Predicated region
    $region2: #{tpu_custom_call.1} parent=1 // pred_check
      _
    $region3: #{tpu_custom_call.1} parent=1 // pred_check_branch
      %14 = sbr.rel (0) target = $region5
    $region4: #{tpu_custom_call.1} parent=1 // pred_region
      %s16 = ssub.s32 128, 128
      %17 = vsyncadd [#allocation3], %s16
      %s19 = sshll.u32 [#allocation2], 4
      %s20 = int_to_ptr.vmem [resolvable:$true] %s19
      %22 = dma.hbm_to_vmem [thread:$0]  %s0, 128, %s20, [#allocation3]
    $region5: #{tpu_custom_call.1} parent=1 // pred_fallthru
      _
    // Predicated region
    $region6: #{tpu_custom_call.1} parent=1 // pred_check
      _
    $region7: #{tpu_custom_call.1} parent=1 // pred_check_branch
      %24 = sbr.rel (0) target = $region9
    $region8: #{tpu_custom_call.1} parent=1 // pred_region
      %s26 = ssub.s32 1024, 1024
      %27 = vsyncadd [#allocation6], %s26
      %s28 = sshll.u32 [#allocation5], 4
      %s29 = int_to_ptr.vmem [resolvable:$true] %s28
      %34 = dma.hbm_to_vmem [thread:$0]  %s1, 1024, %s29, [#allocation6], 64, 64, 4
    $region9: #{tpu_custom_call.1} parent=1 // pred_fallthru
      _
    // Predicated region
    $region10: #{tpu_custom_call.1} parent=1 // pred_check
      _
    $region11: #{tpu_custom_call.1} parent=1 // pred_check_branch
      %36 = sbr.rel (0) target = $region13
    $region12: #{tpu_custom_call.1} parent=1 // pred_region
      %s38 = ssub.s32 128, 128
      %39 = vsyncadd [#allocation6], %s38
      %s41 = sshll.u32 [#allocation7], 4
      %s42 = int_to_ptr.vmem [resolvable:$true] %s41
      %44 = dma.hbm_to_vmem [thread:$0]  %s2, 128, %s42, [#allocation6]
    $region13: #{tpu_custom_call.1} parent=1 // pred_fallthru
      _
    // Predicated region
    $region14: #{tpu_custom_call.1} parent=1 // pred_check
      _
    $region15: #{tpu_custom_call.1} parent=1 // pred_check_branch
      %46 = sbr.rel (0) target = $region17
    $region16: #{tpu_custom_call.1} parent=1 // pred_region
      %s48 = ssub.s32 1024, 1024
      %49 = vsyncadd [#allocation9], %s48
      %s50 = sshll.u32 [#allocation8], 4
      %s51 = int_to_ptr.vmem [resolvable:$true] %s50
      %56 = dma.hbm_to_vmem [thread:$0]  %s3, 1024, %s51, [#allocation9], 64, 64, 4
    $region17: #{tpu_custom_call.1} parent=1 // pred_fallthru
      _
    // Predicated region
    $region18: #{tpu_custom_call.1} parent=1 // pred_check
      _
    $region19: #{tpu_custom_call.1} parent=1 // pred_check_branch
      %58 = sbr.rel (0) target = $region21
    $region20: #{tpu_custom_call.1} parent=1 // pred_region
      %59 = dma.done [#allocation3], 128
    $region21: #{tpu_custom_call.1} parent=1 // pred_fallthru
      _
    // Predicated region
    $region22: #{tpu_custom_call.1} parent=1 // pred_check
      _
    $region23: #{tpu_custom_call.1} parent=1 // pred_check_branch
      %61 = sbr.rel (0) target = $region25
    $region24: #{tpu_custom_call.1} parent=1 // pred_region
      %62 = dma.done [#allocation6], 1024
    $region25: #{tpu_custom_call.1} parent=1 // pred_fallthru
      _
    // Predicated region
    $region26: #{tpu_custom_call.1} parent=1 // pred_check
      _
    $region27: #{tpu_custom_call.1} parent=1 // pred_check_branch
      %64 = sbr.rel (0) target = $region29
    $region28: #{tpu_custom_call.1} parent=1 // pred_region
      %65 = dma.done [#allocation6], 128
    $region29: #{tpu_custom_call.1} parent=1 // pred_fallthru
      _
    // Predicated region
    $region30: #{tpu_custom_call.1} parent=1 // pred_check
      _
    $region31: #{tpu_custom_call.1} parent=1 // pred_check_branch
      %67 = sbr.rel (0) target = $region33
    $region32: #{tpu_custom_call.1} parent=1 // pred_region
      %68 = dma.done [#allocation9], 1024
    $region33: #{tpu_custom_call.1} parent=1 // pred_fallthru
      _
    %v70 = vld [vmem:[#allocation2] sm:$0xff]
    %v71 = vpack.c.bf16 %v70, %v70
    %v72 = vld [vmem:[#allocation7] sm:$0x1]
    %v73 = vld [vmem:[#allocation7 + $0x1] sm:$0x1]
    %v74 = vld [vmem:[#allocation5] sm:$0xf]
    %v75 = vld [vmem:[#allocation5 + $0x4] sm:$0xf]
    %v76 = vld [vmem:[#allocation5 + $0x8] sm:$0xf]
    %v77 = vld [vmem:[#allocation5 + $0xc] sm:$0xf]
    %v78 = vld [vmem:[#allocation5 + $0x10] sm:$0xf]
    %v79 = vld [vmem:[#allocation5 + $0x14] sm:$0xf]
    %v80 = vld [vmem:[#allocation5 + $0x18] sm:$0xf]
    %v81 = vld [vmem:[#allocation5 + $0x1c] sm:$0xf]
    %v82 = vld [vmem:[#allocation5 + $0x20] sm:$0xf]
    %v83 = vld [vmem:[#allocation5 + $0x24] sm:$0xf]
    %v84 = vld [vmem:[#allocation5 + $0x28] sm:$0xf]
    %v85 = vld [vmem:[#allocation5 + $0x2c] sm:$0xf]
    %v86 = vld [vmem:[#allocation5 + $0x30] sm:$0xf]
    %v87 = vld [vmem:[#allocation5 + $0x34] sm:$0xf]
    %v88 = vld [vmem:[#allocation5 + $0x38] sm:$0xf]
    %v89 = vld [vmem:[#allocation5 + $0x3c] sm:$0xf]
    %v90 = vlaneseq
    %v91 = vshrl.u32 %v90, 7
    %v92 = vsub.s32 0, %v91
    %v93 = vrot.slane %v72, %v92
    %v110 = vunpack.c.l.b16 %v74
    %v111 = vunpack.c.l.b16 %v75
    %v112 = vunpack.c.l.b16 %v76
    %v113 = vunpack.c.l.b16 %v77
    %v114 = vunpack.c.l.b16 %v78
    %v115 = vunpack.c.l.b16 %v79
    %v116 = vunpack.c.l.b16 %v80
    %v117 = vunpack.c.l.b16 %v81
    %v118 = vunpack.c.l.b16 %v82
    %v119 = vunpack.c.l.b16 %v83
    %v120 = vunpack.c.l.b16 %v84
    %v121 = vunpack.c.l.b16 %v85
    %v122 = vunpack.c.l.b16 %v86
    %v123 = vunpack.c.l.b16 %v87
    %v124 = vunpack.c.l.b16 %v88
    %v125 = vunpack.c.l.b16 %v89
    %v126 = vpack.c.b16 %v111, %v110
    %v127 = vpack.c.b16 %v113, %v112
    %v128 = vpack.c.b16 %v115, %v114
    %v129 = vpack.c.b16 %v117, %v116
    %v130 = vpack.c.b16 %v119, %v118
    %v131 = vpack.c.b16 %v121, %v120
    %v132 = vpack.c.b16 %v123, %v122
    %v133 = vpack.c.b16 %v125, %v124
    %142 = vmatprep.subr.bf16.mxu0 0
    %143 = vmatpush1.bf16.msra.mxu0 %v126
    %144 = vmatprep.subr.bf16.mxu0 0
    %145 = vmatpush1.bf16.msra.mxu0 %v127
    %146 = vmatprep.subr.bf16.mxu0 0
    %147 = vmatpush1.bf16.msra.mxu0 %v128
    %148 = vmatprep.subr.bf16.mxu0 0
    %149 = vmatpush1.bf16.msra.mxu0 %v129
    %150 = vmatprep.subr.bf16.mxu0 0
    %151 = vmatpush1.bf16.msra.mxu0 %v130
    %152 = vmatprep.subr.bf16.mxu0 0
    %153 = vmatpush1.bf16.msra.mxu0 %v131
    %154 = vmatprep.subr.bf16.mxu0 0
    %155 = vmatpush1.bf16.msra.mxu0 %v132
    %156 = vmatprep.subr.bf16.mxu0 0
    %157 = vmatpush1.bf16.msra.mxu0 %v133
    %158 = vmatprep.subr.bf16.mxu0 0
    %159 = vmatpush1.bf16.msra.mxu0 0
    %160 = vmatprep.subr.bf16.mxu0 0
    %161 = vmatpush1.bf16.msra.mxu0 0
    %162 = vmatprep.subr.bf16.mxu0 0
    %163 = vmatpush1.bf16.msra.mxu0 0
    %164 = vmatprep.subr.bf16.mxu0 0
    %165 = vmatpush1.bf16.msra.mxu0 0
    %166 = vmatprep.subr.bf16.mxu0 0
    %167 = vmatpush1.bf16.msra.mxu0 0
    %168 = vmatprep.subr.bf16.mxu0 0
    %169 = vmatpush1.bf16.msra.mxu0 0
    %170 = vmatprep.subr.bf16.mxu0 0
    %171 = vmatpush1.bf16.msra.mxu0 0
    %172 = vmatprep.subr.bf16.mxu0 0
    %173 = vmatpush1.bf16.msra.mxu0 0
    %174 = vmatprep.mubr.bf16.mxu0 0
    %175 = vmatmul.mubr.bf16.gmra.mrb[0].mxu0 %v71
    %v176 = vpop.f32.mrb[0].mxu0
    %v177 = vadd.f32 %v93, %v176
    %v178 = vpop.f32.mrb[0].mxu0
    %v179 = vpop.f32.mrb[0].mxu0
    %v180 = vpop.f32.mrb[0].mxu0
    %181 = vdwg.mxu0
    %v182 = vadd.f32 %v177, %v70
    %183 = vadd.xlane.f32.xlu0 %v182
    %v184 = vpop.xlane.xlu0 %183
    %v185 = vmul.f32 %v182, %v182
    %186 = vadd.xlane.f32.xlu0 %v185
    %v187 = vpop.xlane.xlu0 %186
    %v188 = vmul.f32 %v184, 0.0078125
    %v189 = vmul.f32 %v187, 0.0078125
    %v190 = vmul.f32 %v188, %v188
    %v191 = vsub.f32 %v189, %v190
    %v192 = vsub.f32 %v182, %v188
    %v193 = vadd.f32 %v191, 1e-05
    %v194 = vrsqrt.pop %v193
    %v195 = vmul.f32 %v192, %v194
    %v196 = vpack.c.bf16 %v195, %v195
    %v197 = vld [vmem:[#allocation8] sm:$0xf]
    %v198 = vld [vmem:[#allocation8 + $0x4] sm:$0xf]
    %v199 = vld [vmem:[#allocation8 + $0x8] sm:$0xf]
    %v200 = vld [vmem:[#allocation8 + $0xc] sm:$0xf]
    %v201 = vld [vmem:[#allocation8 + $0x10] sm:$0xf]
    %v202 = vld [vmem:[#allocation8 + $0x14] sm:$0xf]
    %v203 = vld [vmem:[#allocation8 + $0x18] sm:$0xf]
    %v204 = vld [vmem:[#allocation8 + $0x1c] sm:$0xf]
    %v205 = vld [vmem:[#allocation8 + $0x20] sm:$0xf]
    %v206 = vld [vmem:[#allocation8 + $0x24] sm:$0xf]
    %v207 = vld [vmem:[#allocation8 + $0x28] sm:$0xf]
    %v208 = vld [vmem:[#allocation8 + $0x2c] sm:$0xf]
    %v209 = vld [vmem:[#allocation8 + $0x30] sm:$0xf]
    %v210 = vld [vmem:[#allocation8 + $0x34] sm:$0xf]
    %v211 = vld [vmem:[#allocation8 + $0x38] sm:$0xf]
    %v212 = vld [vmem:[#allocation8 + $0x3c] sm:$0xf]
    %v213 = vlaneseq
    %v214 = vshrl.u32 %v213, 7
    %v215 = vsub.s32 0, %v214
    %v216 = vrot.slane %v73, %v215
    %v233 = vunpack.c.l.b16 %v197
    %v234 = vunpack.c.l.b16 %v198
    %v235 = vunpack.c.l.b16 %v199
    %v236 = vunpack.c.l.b16 %v200
    %v237 = vunpack.c.l.b16 %v201
    %v238 = vunpack.c.l.b16 %v202
    %v239 = vunpack.c.l.b16 %v203
    %v240 = vunpack.c.l.b16 %v204
    %v241 = vunpack.c.l.b16 %v205
    %v242 = vunpack.c.l.b16 %v206
    %v243 = vunpack.c.l.b16 %v207
    %v244 = vunpack.c.l.b16 %v208
    %v245 = vunpack.c.l.b16 %v209
    %v246 = vunpack.c.l.b16 %v210
    %v247 = vunpack.c.l.b16 %v211
    %v248 = vunpack.c.l.b16 %v212
    %v249 = vpack.c.b16 %v234, %v233
    %v250 = vpack.c.b16 %v236, %v235
    %v251 = vpack.c.b16 %v238, %v237
    %v252 = vpack.c.b16 %v240, %v239
    %v253 = vpack.c.b16 %v242, %v241
    %v254 = vpack.c.b16 %v244, %v243
    %v255 = vpack.c.b16 %v246, %v245
    %v256 = vpack.c.b16 %v248, %v247
    %265 = vmatprep.subr.bf16.mxu0 0
    %266 = vmatpush1.bf16.msra.mxu0 %v249
    %267 = vmatprep.subr.bf16.mxu0 0
    %268 = vmatpush1.bf16.msra.mxu0 %v250
    %269 = vmatprep.subr.bf16.mxu0 0
    %270 = vmatpush1.bf16.msra.mxu0 %v251
    %271 = vmatprep.subr.bf16.mxu0 0
    %272 = vmatpush1.bf16.msra.mxu0 %v252
    %273 = vmatprep.subr.bf16.mxu0 0
    %274 = vmatpush1.bf16.msra.mxu0 %v253
    %275 = vmatprep.subr.bf16.mxu0 0
    %276 = vmatpush1.bf16.msra.mxu0 %v254
    %277 = vmatprep.subr.bf16.mxu0 0
    %278 = vmatpush1.bf16.msra.mxu0 %v255
    %279 = vmatprep.subr.bf16.mxu0 0
    %280 = vmatpush1.bf16.msra.mxu0 %v256
    %281 = vmatprep.subr.bf16.mxu0 0
    %282 = vmatpush1.bf16.msra.mxu0 0
    %283 = vmatprep.subr.bf16.mxu0 0
    %284 = vmatpush1.bf16.msra.mxu0 0
    %285 = vmatprep.subr.bf16.mxu0 0
    %286 = vmatpush1.bf16.msra.mxu0 0
    %287 = vmatprep.subr.bf16.mxu0 0
    %288 = vmatpush1.bf16.msra.mxu0 0
    %289 = vmatprep.subr.bf16.mxu0 0
    %290 = vmatpush1.bf16.msra.mxu0 0
    %291 = vmatprep.subr.bf16.mxu0 0
    %292 = vmatpush1.bf16.msra.mxu0 0
    %293 = vmatprep.subr.bf16.mxu0 0
    %294 = vmatpush1.bf16.msra.mxu0 0
    %295 = vmatprep.subr.bf16.mxu0 0
    %296 = vmatpush1.bf16.msra.mxu0 0
    %297 = vmatprep.mubr.bf16.mxu0 0
    %298 = vmatmul.mubr.bf16.gmra.mrb[0].mxu0 %v196
    %v299 = vpop.f32.mrb[0].mxu0
    %v300 = vadd.f32 %v216, %v299
    %v301 = vpop.f32.mrb[0].mxu0
    %v302 = vpop.f32.mrb[0].mxu0
    %v303 = vpop.f32.mrb[0].mxu0
    %304 = vdwg.mxu0
    %305 = vst [vmem:[#allocation10] sm:$0xff] %v300
    // Predicated region
    $region34: #{tpu_custom_call.1} parent=1 // pred_check
      _
    $region35: #{tpu_custom_call.1} parent=1 // pred_check_branch
      %307 = sbr.rel (0) target = $region37
    $region36: #{tpu_custom_call.1} parent=1 // pred_region
      %s309 = ssub.s32 128, 128
      %310 = vsyncadd [#allocation4], %s309
      %s312 = sshll.u32 [#allocation10], 4
      %s313 = int_to_ptr.vmem [resolvable:$true] %s312
      %315 = dma.vmem_to_hbm [thread:$0]  %s313, 128, %s4, [#allocation4]
    $region37: #{tpu_custom_call.1} parent=1 // pred_fallthru
      _
    // Predicated region
    $region38: #{tpu_custom_call.1} parent=1 // pred_check
      _
    $region39: #{tpu_custom_call.1} parent=1 // pred_check_branch
      %317 = sbr.rel (0) target = $region41
    $region40: #{tpu_custom_call.1} parent=1 // pred_region
      %318 = dma.done [#allocation4], 128
    $region41: #{tpu_custom_call.1} parent=1 // pred_fallthru
      _
    %319 = vsyncpa [#allocation3], 1
    %320 = vsyncpa [#allocation6], 1
    %321 = vsyncpa [#allocation9], 1
    %322 = vsyncpa [#allocation4], 1

</llo_original>
